<compile_context>
chip_gen: v5e
topology: v5e:2x2
jax: 0.10.0
libtpu: 0.0.40
codegen_flags: <defaults>
</compile_context>

<pallas_src>
import functools

import jax
import jax.numpy as jnp
from jax.experimental import pallas as pl
from jax.experimental.pallas import tpu as pltpu

_INV_SQRT2 = 0.7071067811865476  # 1/sqrt(2), trace-time f32 literal


# --------------------------------------------------------------------------
# Kernels
# --------------------------------------------------------------------------
def _transform_kernel(x_ref, w1_ref, b1_ref, gamma_ref, beta_ref, t_ref,
                      *, eps, matmul_dtype):
    """dense + exact GELU + LayerNorm for one row tile (tm, H)."""
    # Matmul operands in matmul_dtype (bf16 fast MXU path); f32 accumulation.
    x = x_ref[...].astype(matmul_dtype)
    h = jnp.dot(x, w1_ref[...], preferred_element_type=jnp.float32)
    h = h + b1_ref[...]                                   # b1 kept in f32
    # exact GELU (erf formulation), matching nn.GELU(approximate='none')
    h = 0.5 * h * (1.0 + jax.lax.erf(h * _INV_SQRT2))
    # LayerNorm over the hidden dim (f32 math)
    mean = jnp.mean(h, axis=-1, keepdims=True)
    centered = h - mean
    var = jnp.mean(centered * centered, axis=-1, keepdims=True)
    t = centered * jax.lax.rsqrt(var + eps)
    t = t * gamma_ref[...] + beta_ref[...]
    t_ref[...] = t.astype(t_ref.dtype)


def _decoder_kernel(t_ref, w2_ref, b2_ref, out_ref):
    """logits tile = t_tile @ W2_tile + b2_tile (full K = H per grid step)."""
    acc = jnp.dot(t_ref[...], w2_ref[...], preferred_element_type=jnp.float32)
    out_ref[...] = (acc + b2_ref[...]).astype(out_ref.dtype)


# --------------------------------------------------------------------------
# Parameter preparation (call ONCE at model setup)
# --------------------------------------------------------------------------
def prepare_bert_lm_head_params(w1, b1, gamma, beta, w2, b2,
                                *, matmul_dtype=jnp.bfloat16):
    """Cast / reshape head parameters once so the per-call wrapper does no
    full-weight passes over HBM.  Weights are (in, out)."""
    H = w1.shape[0]
    V = w2.shape[1]
    return {
        "w1": w1.astype(matmul_dtype),                      # (H, H)
        "b1": b1.reshape(1, H).astype(jnp.float32),
        "gamma": gamma.reshape(1, H).astype(jnp.float32),
        "beta": beta.reshape(1, H).astype(jnp.float32),
        "w2": w2.astype(matmul_dtype),                      # (H, V)
        "b2": b2.reshape(1, V).astype(jnp.float32),
    }


def _round_up(a, b):
    return (a + b - 1) // b * b


# --------------------------------------------------------------------------
# Forward pass
# --------------------------------------------------------------------------
def bert_lm_prediction_head(x, params, *, eps=1e-12,
                            tm_transform=256, tm_decoder=1024, tv=512,
                            out_dtype=jnp.bfloat16, vocab_outer=False):
    """x: (B, S, H); params from prepare_bert_lm_head_params.

    Returns logits (B, S, V) in out_dtype (bf16 by default to halve the
    dominant HBM writeback; use jnp.float32 for an exact-dtype match).
    vocab_outer=True puts the vocab axis outermost in the decoder grid
    (preferable on v7x megacore so per-TC W2 traffic is halved).
    """
    B, S, H = x.shape
    M = B * S
    V = params["w2"].shape[1]
    matmul_dtype = params["w1"].dtype

    x2 = x.reshape(M, H)                     # contiguous reshape, no copy

    # --- tile sizing (boundaries handled by Pallas masked partial blocks) ---
    tm_t = min(tm_transform, M)
    tm_d = min(tm_decoder, M)
    tv_eff = min(tv, _round_up(V, 128))      # lane-dense vocab tile
    grid_mt = pl.cdiv(M, tm_t)
    grid_md = pl.cdiv(M, tm_d)
    grid_v = pl.cdiv(V, tv_eff)

    # --- kernel 1: row-tiled dense + GELU + LayerNorm -----------------------
    t = pl.pallas_call(
        functools.partial(_transform_kernel, eps=float(eps),
                          matmul_dtype=matmul_dtype),
        out_shape=jax.ShapeDtypeStruct((M, H), matmul_dtype),
        grid_spec=pltpu.PrefetchScalarGridSpec(
            num_scalar_prefetch=0,
            grid=(grid_mt,),
            in_specs=[
                pl.BlockSpec((tm_t, H), lambda m: (m, 0)),   # x row tile
                pl.BlockSpec((H, H), lambda m: (0, 0)),      # W1 (resident)
                pl.BlockSpec((1, H), lambda m: (0, 0)),      # b1
                pl.BlockSpec((1, H), lambda m: (0, 0)),      # LN gamma
                pl.BlockSpec((1, H), lambda m: (0, 0)),      # LN beta
            ],
            out_specs=pl.BlockSpec((tm_t, H), lambda m: (m, 0)),
        ),
        compiler_params=pltpu.CompilerParams(
            dimension_semantics=("parallel",)),
    )(x2, params["w1"], params["b1"], params["gamma"], params["beta"])

    # --- kernel 2: (m, v) tiled decoder matmul ------------------------------
    if vocab_outer:
        grid = (grid_v, grid_md)
        t_map = lambda v, m: (m, 0)
        w2_map = lambda v, m: (0, v)
        b2_map = lambda v, m: (0, v)
        o_map = lambda v, m: (m, v)
    else:
        grid = (grid_md, grid_v)
        t_map = lambda m, v: (m, 0)
        w2_map = lambda m, v: (0, v)
        b2_map = lambda m, v: (0, v)
        o_map = lambda m, v: (m, v)

    logits = pl.pallas_call(
        _decoder_kernel,
        out_shape=jax.ShapeDtypeStruct((M, V), out_dtype),
        grid_spec=pltpu.PrefetchScalarGridSpec(
            num_scalar_prefetch=0,
            grid=grid,
            in_specs=[
                pl.BlockSpec((tm_d, H), t_map),        # t row tile
                pl.BlockSpec((H, tv_eff), w2_map),     # W2 vocab tile
                pl.BlockSpec((1, tv_eff), b2_map),     # b2 vocab tile
            ],
            out_specs=pl.BlockSpec((tm_d, tv_eff), o_map),
        ),
        compiler_params=pltpu.CompilerParams(
            dimension_semantics=("parallel", "parallel")),
    )(t, params["w2"], params["b2"])

    return logits.reshape(B, S, V)


# --------------------------------------------------------------------------
# Pure-JAX reference
# --------------------------------------------------------------------------
def _reference(x, w1, b1, gamma, beta, w2, b2, eps=1e-12):
    h = jnp.einsum("bsh,hk->bsk", x, w1) + b1
    h = 0.5 * h * (1.0 + jax.lax.erf(h / jnp.sqrt(2.0)))
    mean = jnp.mean(h, axis=-1, keepdims=True)
    var = jnp.mean((h - mean) ** 2, axis=-1, keepdims=True)
    t = (h - mean) * jax.lax.rsqrt(var + eps) * gamma + beta
    return jnp.einsum("bsh,hv->bsv", t, w2) + b2


if __name__ == "__main__":
    # Small synthetic config: batch=2, seq=8, hidden=128, vocab=300.
    # V=300 deliberately exercises the masked / ragged-vocab boundary path
    # (like the real BERT vocab 30522 vs a 512-wide vocab tile).
    B, S, H, V = 2, 8, 128, 300
    key = jax.random.PRNGKey(0)
    kx, k1, kb1, kg, kbeta, k2, kb2 = jax.random.split(key, 7)

    x = jax.random.normal(kx, (B, S, H), dtype=jnp.float32)
    # deterministic parameter init (weights stored as (in, out))
    w1 = jax.random.normal(k1, (H, H), dtype=jnp.float32) * 0.02
    b1 = jax.random.normal(kb1, (H,), dtype=jnp.float32) * 0.02
    gamma = 1.0 + 0.05 * jax.random.normal(kg, (H,), dtype=jnp.float32)
    beta = 0.05 * jax.random.normal(kbeta, (H,), dtype=jnp.float32)
    w2 = jax.random.normal(k2, (H, V), dtype=jnp.float32) * 0.02
    b2 = jax.random.normal(kb2, (V,), dtype=jnp.float32) * 0.02

    ref = _reference(x, w1, b1, gamma, beta, w2, b2)

    # (1) f32 matmul operands + f32 logits: tight tolerance vs. f32 reference.
    params_f32 = prepare_bert_lm_head_params(w1, b1, gamma, beta, w2, b2,
                                             matmul_dtype=jnp.float32)
    logits_f32 = bert_lm_prediction_head(x, params_f32, out_dtype=jnp.float32)
    jax.block_until_ready(logits_f32)
    assert logits_f32.shape == (B, S, V)
    assert jnp.allclose(logits_f32, ref, atol=1e-3, rtol=1e-3)

    # (2) Default fast path: bf16 matmul operands, bf16 logits, f32 accumulation.
    params_bf16 = prepare_bert_lm_head_params(w1, b1, gamma, beta, w2, b2)
    logits_bf16 = bert_lm_prediction_head(x, params_bf16)
    jax.block_until_ready(logits_bf16)
    assert logits_bf16.shape == (B, S, V)
    assert jnp.allclose(logits_bf16.astype(jnp.float32), ref, atol=2e-2, rtol=2e-2)

    # (3) Vocab-outermost decoder grid (v7x megacore-friendly ordering).
    logits_vo = bert_lm_prediction_head(x, params_bf16, vocab_outer=True)
    jax.block_until_ready(logits_vo)
    assert logits_vo.shape == (B, S, V)
    assert jnp.allclose(logits_vo.astype(jnp.float32), ref, atol=2e-2, rtol=2e-2)

    print("KERNEL_OK")
</pallas_src>

<mosaic_0001>
module attributes {stable_mosaic.version = 11 : i64} {
  func.func @_transform_kernel(%arg0: i32, %arg1: memref<16x128xf32, #tpu.memory_space<vmem>>, %arg2: memref<128x128xf32, #tpu.memory_space<vmem>>, %arg3: memref<1x128xf32, #tpu.memory_space<vmem>>, %arg4: memref<1x128xf32, #tpu.memory_space<vmem>>, %arg5: memref<1x128xf32, #tpu.memory_space<vmem>>, %arg6: memref<16x128xf32, #tpu.memory_space<vmem>>) attributes {dimension_semantics = [#tpu.dimension_semantics<parallel>], iteration_bounds = array<i64: 1>, scalar_prefetch = 0 : i64, scratch_operands = 0 : i64, tpu.core_type = #tpu.core_type<tc>, window_params = [{transform_indices = @transform_0, window_bounds = array<i64: 16, 128>}, {pipeline_mode = #tpu.pipeline_mode<synchronous>, transform_indices = @transform_1, window_bounds = array<i64: 128, 128>}, {pipeline_mode = #tpu.pipeline_mode<synchronous>, transform_indices = @transform_2, window_bounds = array<i64: 1, 128>}, {pipeline_mode = #tpu.pipeline_mode<synchronous>, transform_indices = @transform_3, window_bounds = array<i64: 1, 128>}, {pipeline_mode = #tpu.pipeline_mode<synchronous>, transform_indices = @transform_4, window_bounds = array<i64: 1, 128>}, {transform_indices = @transform_5, window_bounds = array<i64: 16, 128>}]} {
    %c0 = arith.constant 0 : index
    %c0_0 = arith.constant 0 : index
    %0 = vector.load %arg1[%c0, %c0_0] : memref<16x128xf32, #tpu.memory_space<vmem>>, vector<16x128xf32>
    %c0_1 = arith.constant 0 : index
    %c0_2 = arith.constant 0 : index
    %1 = vector.load %arg2[%c0_1, %c0_2] : memref<128x128xf32, #tpu.memory_space<vmem>>, vector<128x128xf32>
    %cst = arith.constant dense<0.000000e+00> : vector<16x128xf32>
    %2 = tpu.matmul %0, %1, %cst {dimension_numbers = #tpu.dot_dimension_numbers<[1], [0], [0], [1], [0, 0, 1, 1], [], []>} : vector<16x128xf32>, vector<128x128xf32>, vector<16x128xf32> -> vector<16x128xf32>
    %c0_3 = arith.constant 0 : index
    %c0_4 = arith.constant 0 : index
    %3 = vector.load %arg3[%c0_3, %c0_4] : memref<1x128xf32, #tpu.memory_space<vmem>>, vector<1x128xf32>
    %4 = vector.broadcast %3 : vector<1x128xf32> to vector<16x128xf32>
    %5 = arith.addf %2, %4 : vector<16x128xf32>
    %cst_5 = arith.constant 5.000000e-01 : f32
    %6 = vector.broadcast %cst_5 : f32 to vector<16x128xf32>
    %7 = arith.mulf %6, %5 : vector<16x128xf32>
    %cst_6 = arith.constant 0.707106769 : f32
    %8 = vector.broadcast %cst_6 : f32 to vector<16x128xf32>
    %9 = arith.mulf %5, %8 : vector<16x128xf32>
    %10 = math.erf %9 : vector<16x128xf32>
    %cst_7 = arith.constant 1.000000e+00 : f32
    %11 = vector.broadcast %cst_7 : f32 to vector<16x128xf32>
    %12 = arith.addf %11, %10 : vector<16x128xf32>
    %13 = arith.mulf %7, %12 : vector<16x128xf32>
    %cst_8 = arith.constant dense<0.000000e+00> : vector<16xf32>
    %14 = vector.multi_reduction <add>, %13, %cst_8 [1] : vector<16x128xf32> to vector<16xf32>
    %15 = vector.shape_cast %14 : vector<16xf32> to vector<16x1xf32>
    %cst_9 = arith.constant 1.280000e+02 : f32
    %16 = vector.broadcast %cst_9 : f32 to vector<16x1xf32>
    %17 = arith.divf %15, %16 : vector<16x1xf32>
    %18 = vector.broadcast %17 : vector<16x1xf32> to vector<16x128xf32>
    %19 = arith.subf %13, %18 : vector<16x128xf32>
    %20 = arith.mulf %19, %19 : vector<16x128xf32>
    %cst_10 = arith.constant dense<0.000000e+00> : vector<16xf32>
    %21 = vector.multi_reduction <add>, %20, %cst_10 [1] : vector<16x128xf32> to vector<16xf32>
    %22 = vector.shape_cast %21 : vector<16xf32> to vector<16x1xf32>
    %cst_11 = arith.constant 1.280000e+02 : f32
    %23 = vector.broadcast %cst_11 : f32 to vector<16x1xf32>
    %24 = arith.divf %22, %23 : vector<16x1xf32>
    %cst_12 = arith.constant 9.99999996E-13 : f32
    %25 = vector.broadcast %cst_12 : f32 to vector<16x1xf32>
    %26 = arith.addf %24, %25 : vector<16x1xf32>
    %27 = math.rsqrt %26 : vector<16x1xf32>
    %28 = vector.broadcast %27 : vector<16x1xf32> to vector<16x128xf32>
    %29 = arith.mulf %19, %28 : vector<16x128xf32>
    %c0_13 = arith.constant 0 : index
    %c0_14 = arith.constant 0 : index
    %30 = vector.load %arg4[%c0_13, %c0_14] : memref<1x128xf32, #tpu.memory_space<vmem>>, vector<1x128xf32>
    %31 = vector.broadcast %30 : vector<1x128xf32> to vector<16x128xf32>
    %32 = arith.mulf %29, %31 : vector<16x128xf32>
    %c0_15 = arith.constant 0 : index
    %c0_16 = arith.constant 0 : index
    %33 = vector.load %arg5[%c0_15, %c0_16] : memref<1x128xf32, #tpu.memory_space<vmem>>, vector<1x128xf32>
    %34 = vector.broadcast %33 : vector<1x128xf32> to vector<16x128xf32>
    %35 = arith.addf %32, %34 : vector<16x128xf32>
    %c0_17 = arith.constant 0 : index
    %c0_18 = arith.constant 0 : index
    %36 = vector.load %arg6[%c0_17, %c0_18] : memref<16x128xf32, #tpu.memory_space<vmem>>, vector<16x128xf32>
    tpu.vector_store %arg6[%c0_17, %c0_18], %35 {strides = array<i32>} : memref<16x128xf32, #tpu.memory_space<vmem>>, vector<16x128xf32>,
    return
  }
  func.func @transform_0(%arg0: i32) -> (i32, i32) {
    %c0_i32 = arith.constant 0 : i32
    %c0_i32_0 = arith.constant 0 : i32
    return %arg0, %c0_i32 : i32, i32
  }
  func.func @transform_1(%arg0: i32) -> (i32, i32) {
    %c0_i32 = arith.constant 0 : i32
    %c0_i32_0 = arith.constant 0 : i32
    %c0_i32_1 = arith.constant 0 : i32
    return %c0_i32, %c0_i32_0 : i32, i32
  }
  func.func @transform_2(%arg0: i32) -> (i32, i32) {
    %c0_i32 = arith.constant 0 : i32
    %c0_i32_0 = arith.constant 0 : i32
    %c0_i32_1 = arith.constant 0 : i32
    return %c0_i32, %c0_i32_0 : i32, i32
  }
  func.func @transform_3(%arg0: i32) -> (i32, i32) {
    %c0_i32 = arith.constant 0 : i32
    %c0_i32_0 = arith.constant 0 : i32
    %c0_i32_1 = arith.constant 0 : i32
    return %c0_i32, %c0_i32_0 : i32, i32
  }
  func.func @transform_4(%arg0: i32) -> (i32, i32) {
    %c0_i32 = arith.constant 0 : i32
    %c0_i32_0 = arith.constant 0 : i32
    %c0_i32_1 = arith.constant 0 : i32
    return %c0_i32, %c0_i32_0 : i32, i32
  }
  func.func @transform_5(%arg0: i32) -> (i32, i32) {
    %c0_i32 = arith.constant 0 : i32
    %c0_i32_0 = arith.constant 0 : i32
    return %arg0, %c0_i32 : i32, i32
  }
}

</mosaic_0001>

<llo_original>
// kernel: tpu_custom_call.1
$region0: #{tpu_custom_call.1}
  #allocation0 [shape = 'u32[]', space=smem, size = 0x4, offset = 0x4, fixed_abs, tag = 'smem constant byte address 0x4 - core index']
  #allocation1 [shape = 'u32[72,128]{1,0:T(1,128)}', space=vmem, size = 0x9000, scoped, tag = 'internal scratch']
  %s0 = inlined_call_operand.hbm [shape: f32[16,128], index: 0, kind: input, shape index: {}]
  %s1 = inlined_call_operand.hbm [shape: f32[128,128], index: 1, kind: input, shape index: {}]
  %s2 = inlined_call_operand.vmem [shape: f32[1,128], index: 2, kind: input, shape index: {}]
  %s3 = inlined_call_operand.vmem [shape: f32[1,128], index: 3, kind: input, shape index: {}]
  %s4 = inlined_call_operand.vmem [shape: f32[1,128], index: 4, kind: input, shape index: {}]
  %s5 = inlined_call_operand.hbm [shape: f32[16,128], index: 5, kind: output, shape index: {}]
  %s6 = sld [smem:[#allocation0]]
  $region38: #{tpu_custom_call.1} parent=0
    _
  %s8 = ssub.s32 1, %s6
  %s9 = scalar_select 0, %s8, %s6
  $region1: #{tpu_custom_call.1} parent=0
    #allocation2 [shape = 'u8[8192]{0}', space=vmem, size = 0x2000, scoped, tag = 'input window, operand 0, single buffered']
    #allocation3 [shape = 's32[1]{0}', space=sflag, size = 0x4, scoped, tag = 'scoped memory for tpu_custom_call.1']
    #allocation4 [shape = 's32[1]{0}', space=sflag, size = 0x4, scoped, tag = 'scoped memory for tpu_custom_call.1']
    #allocation5 [shape = 'u8[65536]{0}', space=vmem, size = 0x10000, scoped, tag = 'input window, operand 1, single buffered']
    #allocation6 [shape = 's32[1]{0}', space=sflag, size = 0x4, scoped, tag = 'scoped memory for tpu_custom_call.1']
    #allocation7 [shape = 'u8[8192]{0}', space=vmem, size = 0x2000, scoped, tag = 'output window, operand 0, single buffered']
    %10 = vsyncpa [#allocation3], 0
    %11 = vsyncpa [#allocation6], 0
    %12 = vsyncpa [#allocation4], 0
    // Predicated region
    $region2: #{tpu_custom_call.1} parent=1 // pred_check
      _
    $region3: #{tpu_custom_call.1} parent=1 // pred_check_branch
      %14 = sbr.rel (0) target = $region5
    $region4: #{tpu_custom_call.1} parent=1 // pred_region
      %16 = vsyncadd [#allocation3], 0
      %s17 = sshll.u32 %s0, 4
      %s18 = int_to_ptr.hbm [resolvable:$true] %s17
      %s19 = sshll.u32 [#allocation2], 4
      %s20 = int_to_ptr.vmem [resolvable:$true] %s19
      %25 = dma.hbm_to_vmem [thread:$0]  %s18, 256, %s20, [#allocation3], 128, 128, 8
    $region5: #{tpu_custom_call.1} parent=1 // pred_fallthru
      _
    // Predicated region
    $region6: #{tpu_custom_call.1} parent=1 // pred_check
      _
    $region7: #{tpu_custom_call.1} parent=1 // pred_check_branch
      %27 = sbr.rel (0) target = $region9
    $region8: #{tpu_custom_call.1} parent=1 // pred_region
      %29 = vsyncadd [#allocation6], 0
      %s30 = sshll.u32 %s1, 4
      %s31 = int_to_ptr.hbm [resolvable:$true] %s30
      %s32 = sshll.u32 [#allocation5], 4
      %s33 = int_to_ptr.vmem [resolvable:$true] %s32
      %38 = dma.hbm_to_vmem [thread:$0]  %s31, 2048, %s33, [#allocation6], 128, 128, 8
    $region9: #{tpu_custom_call.1} parent=1 // pred_fallthru
      _
    // Predicated region
    $region10: #{tpu_custom_call.1} parent=1 // pred_check
      _
    $region11: #{tpu_custom_call.1} parent=1 // pred_check_branch
      %40 = sbr.rel (0) target = $region13
    $region12: #{tpu_custom_call.1} parent=1 // pred_region
      _
    $region13: #{tpu_custom_call.1} parent=1 // pred_fallthru
      _
    // Predicated region
    $region14: #{tpu_custom_call.1} parent=1 // pred_check
      _
    $region15: #{tpu_custom_call.1} parent=1 // pred_check_branch
      %42 = sbr.rel (0) target = $region17
    $region16: #{tpu_custom_call.1} parent=1 // pred_region
      _
    $region17: #{tpu_custom_call.1} parent=1 // pred_fallthru
      _
    // Predicated region
    $region18: #{tpu_custom_call.1} parent=1 // pred_check
      _
    $region19: #{tpu_custom_call.1} parent=1 // pred_check_branch
      %44 = sbr.rel (0) target = $region21
    $region20: #{tpu_custom_call.1} parent=1 // pred_region
      _
    $region21: #{tpu_custom_call.1} parent=1 // pred_fallthru
      _
    // Predicated region
    $region22: #{tpu_custom_call.1} parent=1 // pred_check
      _
    $region23: #{tpu_custom_call.1} parent=1 // pred_check_branch
      %46 = sbr.rel (0) target = $region25
    $region24: #{tpu_custom_call.1} parent=1 // pred_region
      %48 = dma.done [#allocation3], 256
    $region25: #{tpu_custom_call.1} parent=1 // pred_fallthru
      _
    // Predicated region
    $region26: #{tpu_custom_call.1} parent=1 // pred_check
      _
    $region27: #{tpu_custom_call.1} parent=1 // pred_check_branch
      %50 = sbr.rel (0) target = $region29
    $region28: #{tpu_custom_call.1} parent=1 // pred_region
      %52 = dma.done [#allocation6], 2048
    $region29: #{tpu_custom_call.1} parent=1 // pred_fallthru
      _
    %v53 = vld [vmem:[#allocation2] sm:$0xff]
    %v54 = vld [vmem:[#allocation2 + $0x8] sm:$0xff]
    %v55 = vld [vmem:[#allocation5] sm:$0xff]
    %v56 = vld [vmem:[#allocation5 + $0x8] sm:$0xff]
    %v57 = vld [vmem:[#allocation5 + $0x10] sm:$0xff]
    %v58 = vld [vmem:[#allocation5 + $0x18] sm:$0xff]
    %v59 = vld [vmem:[#allocation5 + $0x20] sm:$0xff]
    %v60 = vld [vmem:[#allocation5 + $0x28] sm:$0xff]
    %v61 = vld [vmem:[#allocation5 + $0x30] sm:$0xff]
    %v62 = vld [vmem:[#allocation5 + $0x38] sm:$0xff]
    %v63 = vld [vmem:[#allocation5 + $0x40] sm:$0xff]
    %v64 = vld [vmem:[#allocation5 + $0x48] sm:$0xff]
    %v65 = vld [vmem:[#allocation5 + $0x50] sm:$0xff]
    %v66 = vld [vmem:[#allocation5 + $0x58] sm:$0xff]
    %v67 = vld [vmem:[#allocation5 + $0x60] sm:$0xff]
    %v68 = vld [vmem:[#allocation5 + $0x68] sm:$0xff]
    %v69 = vld [vmem:[#allocation5 + $0x70] sm:$0xff]
    %v70 = vld [vmem:[#allocation5 + $0x78] sm:$0xff]
    %v71 = vld [vmem:[%s2] sm:$0x1]
    %v73 = vperm.slane %v71, 0
    %75 = vmatpush.msra.mxu0 %v70
    %76 = vmatpush.msra.mxu0 %v69
    %77 = vmatpush.msra.mxu0 %v68
    %78 = vmatpush.msra.mxu0 %v67
    %79 = vmatpush.msra.mxu0 %v66
    %80 = vmatpush.msra.mxu0 %v65
    %81 = vmatpush.msra.mxu0 %v64
    %82 = vmatpush.msra.mxu0 %v63
    %83 = vmatpush.msra.mxu0 %v62
    %84 = vmatpush.msra.mxu0 %v61
    %85 = vmatpush.msra.mxu0 %v60
    %86 = vmatpush.msra.mxu0 %v59
    %87 = vmatpush.msra.mxu0 %v58
    %88 = vmatpush.msra.mxu0 %v57
    %89 = vmatpush.msra.mxu0 %v56
    %90 = vmatpush.msra.mxu0 %v55
    %91 = vmatmul.f32.gmra.mxu0 %v53
    %v92 = vpop.f32.mrf.mxu0
    %v93 = vadd.f32 %v73, %v92
    %94 = vmatmul.f32.gmra.mxu0 %v54
    %v95 = vpop.f32.mrf.mxu0
    %v96 = vadd.f32 %v73, %v95
    %97 = vdwg.mxu0
    %v98 = vmul.f32 %v93, 0.5
    %v99 = vmul.f32 %v96, 0.5
    %v100 = vmul.f32 %v93, 0.70710677
    %v101 = vmul.f32 %v96, 0.70710677
    %v102 = vmul.f32 %v100, %v100
    %v103 = vmin.f32 16.0, %v102
    %v104 = vmul.f32 %v103, 2.1237322e-06
    %v105 = vadd.f32 %v104, 0.00028619796
    %v106 = vmul.f32 %v103, %v105
    %v107 = vadd.f32 %v106, 0.0036580483
    %v108 = vmul.f32 %v103, %v107
    %v109 = vadd.f32 %v108, 0.05243302
    %v110 = vmul.f32 %v103, %v109
    %v111 = vadd.f32 %v110, 0.18741608
    %v112 = vmul.f32 %v103, %v111
    %v113 = vadd.f32 %v112, 1.1283791
    %v114 = vmul.f32 %v100, %v113
    %v115 = vmul.f32 %v103, 3.8918573e-05
    %v116 = vadd.f32 %v115, 0.001143296
    %v117 = vmul.f32 %v103, %v116
    %v118 = vadd.f32 %v117, 0.014752088
    %v119 = vmul.f32 %v103, %v118
    %v120 = vadd.f32 %v119, 0.112945676
    %v121 = vmul.f32 %v103, %v120
    %v122 = vadd.f32 %v121, 0.4994258
    %v123 = vmul.f32 %v103, %v122
    %v124 = vadd.f32 %v123, 1.0
    %v125 = vrcp.pop %v124
    %v126 = vmul.f32 %v124, %v125
    %v127 = vsub.f32 1.0, %v126
    %v128 = vmul.f32 %v125, %v127
    %v129 = vadd.f32 %v125, %v128
    %vm130 = vweird.f32 %v124
    %vm131 = vweird.f32 %v125
    %vm132 = vmor %vm130, %vm131
    %v133 = vsel %vm132, %v125, %v129
    %v134 = vand.u32 2147483647, %v124
    %vm135 = vcmp.eq.f32.partialorder %v134, 8.507059e+37
    %v136 = vand.u32 %v124, 2147483648
    %v137 = vor.u32 1.1754944e-38, %v136
    %v138 = vsel %vm135, %v137, %v133
    %v139 = vmul.f32 %v114, %v138
    %v140 = vmin.f32 %v139, 1.0
    %v141 = vmax.f32 %v140, -1.0
    %v142 = vmul.f32 %v101, %v101
    %v143 = vmin.f32 16.0, %v142
    %v144 = vmul.f32 %v143, 2.1237322e-06
    %v145 = vadd.f32 %v144, 0.00028619796
    %v146 = vmul.f32 %v143, %v145
    %v147 = vadd.f32 %v146, 0.0036580483
    %v148 = vmul.f32 %v143, %v147
    %v149 = vadd.f32 %v148, 0.05243302
    %v150 = vmul.f32 %v143, %v149
    %v151 = vadd.f32 %v150, 0.18741608
    %v152 = vmul.f32 %v143, %v151
    %v153 = vadd.f32 %v152, 1.1283791
    %v154 = vmul.f32 %v101, %v153
    %v155 = vmul.f32 %v143, 3.8918573e-05
    %v156 = vadd.f32 %v155, 0.001143296
    %v157 = vmul.f32 %v143, %v156
    %v158 = vadd.f32 %v157, 0.014752088
    %v159 = vmul.f32 %v143, %v158
    %v160 = vadd.f32 %v159, 0.112945676
    %v161 = vmul.f32 %v143, %v160
    %v162 = vadd.f32 %v161, 0.4994258
    %v163 = vmul.f32 %v143, %v162
    %v164 = vadd.f32 %v163, 1.0
    %v165 = vrcp.pop %v164
    %v166 = vmul.f32 %v164, %v165
    %v167 = vsub.f32 1.0, %v166
    %v168 = vmul.f32 %v165, %v167
    %v169 = vadd.f32 %v165, %v168
    %vm170 = vweird.f32 %v164
    %vm171 = vweird.f32 %v165
    %vm172 = vmor %vm170, %vm171
    %v173 = vsel %vm172, %v165, %v169
    %v174 = vand.u32 2147483647, %v164
    %vm175 = vcmp.eq.f32.partialorder %v174, 8.507059e+37
    %v176 = vand.u32 %v164, 2147483648
    %v177 = vor.u32 1.1754944e-38, %v176
    %v178 = vsel %vm175, %v177, %v173
    %v179 = vmul.f32 %v154, %v178
    %v180 = vmin.f32 %v179, 1.0
    %v181 = vmax.f32 %v180, -1.0
    %v182 = vadd.f32 %v141, 1.0
    %v183 = vadd.f32 %v181, 1.0
    %v184 = vmul.f32 %v98, %v182
    %v185 = vmul.f32 %v99, %v183
    %186 = vadd.xlane.f32.xlu0 %v184
    %v187 = vpop.xlane.xlu0 %186
    %188 = vadd.xlane.f32.xlu0 %v185
    %v189 = vpop.xlane.xlu0 %188
    %v190 = vrcp.pop 128.0
    %v191 = vmul.f32 128.0, %v190
    %v192 = vsub.f32 1.0, %v191
    %v193 = vmul.f32 %v190, %v192
    %v194 = vadd.f32 %v190, %v193
    %vm195 = vweird.f32 %v190
    %v196 = vsel %vm195, %v190, %v194
    %v197 = vmul.f32 %v187, %v196
    %v198 = vmul.f32 %v189, %v196
    %v199 = vsub.f32 %v184, %v197
    %v200 = vsub.f32 %v185, %v198
    %v201 = vmul.f32 %v199, %v199
    %v202 = vmul.f32 %v200, %v200
    %203 = vadd.xlane.f32.xlu0 %v201
    %v204 = vpop.xlane.xlu0 %203
    %205 = vadd.xlane.f32.xlu0 %v202
    %v206 = vpop.xlane.xlu0 %205
    %v207 = vmul.f32 %v204, %v196
    %v208 = vmul.f32 %v206, %v196
    %v209 = vadd.f32 %v207, 1e-12
    %v210 = vadd.f32 %v208, 1e-12
    %v211 = vrsqrt.pop %v209
    %v212 = vmul.f32 %v211, %v209
    %v213 = vmul.f32 %v212, %v211
    %v214 = vmul.f32 0.5, %v213
    %v215 = vsub.f32 1.5, %v214
    %v216 = vmul.f32 %v211, %v215
    %vm217 = vweird.f32 %v209
    %vm218 = vweird.f32 %v211
    %vm219 = vmor %vm217, %vm218
    %v220 = vsel %vm219, %v211, %v216
    %v221 = vrsqrt.pop %v210
    %v222 = vmul.f32 %v221, %v210
    %v223 = vmul.f32 %v222, %v221
    %v224 = vmul.f32 0.5, %v223
    %v225 = vsub.f32 1.5, %v224
    %v226 = vmul.f32 %v221, %v225
    %vm227 = vweird.f32 %v210
    %vm228 = vweird.f32 %v221
    %vm229 = vmor %vm227, %vm228
    %v230 = vsel %vm229, %v221, %v226
    %v231 = vmul.f32 %v199, %v220
    %v232 = vmul.f32 %v200, %v230
    %v233 = vld [vmem:[%s3] sm:$0x1]
    %v235 = vperm.slane %v233, 0
    %v237 = vmul.f32 %v231, %v235
    %v238 = vmul.f32 %v232, %v235
    %v239 = vld [vmem:[%s4] sm:$0x1]
    %v241 = vperm.slane %v239, 0
    %v243 = vadd.f32 %v237, %v241
    %v244 = vadd.f32 %v238, %v241
    %245 = vst [vmem:[#allocation7] sm:$0xff] %v243
    %246 = vst [vmem:[#allocation7 + $0x8] sm:$0xff] %v244
    // Predicated region
    $region30: #{tpu_custom_call.1} parent=1 // pred_check
      _
    $region31: #{tpu_custom_call.1} parent=1 // pred_check_branch
      %248 = sbr.rel (0) target = $region33
    $region32: #{tpu_custom_call.1} parent=1 // pred_region
      %250 = vsyncadd [#allocation4], 0
      %s251 = sshll.u32 [#allocation7], 4
      %s252 = int_to_ptr.vmem [resolvable:$true] %s251
      %s253 = sshll.u32 %s5, 4
      %s254 = int_to_ptr.hbm [resolvable:$true] %s253
      %259 = dma.vmem_to_hbm [thread:$0]  %s252, 256, %s254, [#allocation4], 128, 128, 8
    $region33: #{tpu_custom_call.1} parent=1 // pred_fallthru
      _
    // Predicated region
    $region34: #{tpu_custom_call.1} parent=1 // pred_check
      _
    $region35: #{tpu_custom_call.1} parent=1 // pred_check_branch
      %261 = sbr.rel (0) target = $region37
    $region36: #{tpu_custom_call.1} parent=1 // pred_region
      %263 = dma.done [#allocation4], 256
    $region37: #{tpu_custom_call.1} parent=1 // pred_fallthru
      _
    %264 = vsyncpa [#allocation3], 1
    %265 = vsyncpa [#allocation6], 1
    %266 = vsyncpa [#allocation4], 1

</llo_original>
